<compile_context>
chip_gen: v7x
topology: tpu7x:2x2x1
jax: 0.10.0
libtpu: 0.0.40
codegen_flags: <defaults>
</compile_context>

<pallas_src>
import functools

import jax
import jax.numpy as jnp
from jax.experimental import pallas as pl
from jax.experimental.pallas import tpu as pltpu


def _dqn_mlp_kernel(s_ref, a_ref,
                    w1s_ref, w1a_ref, b1_ref,
                    w2_ref, b2_ref,
                    w3_ref, b3_ref,
                    w4_ref, b4_ref,
                    o_ref):
    """One batch-tile of the 4-layer MLP. All operands resident in VMEM."""
    s = s_ref[...]
    a = a_ref[...]

    # Layer 1: concat folded into two small dots (s@W1s + a@W1a).
    h = (jnp.dot(s, w1s_ref[...], preferred_element_type=jnp.float32)
         + jnp.dot(a, w1a_ref[...], preferred_element_type=jnp.float32)
         + b1_ref[...])
    h = jnp.maximum(h, 0.0)

    h = jnp.maximum(
        jnp.dot(h, w2_ref[...], preferred_element_type=jnp.float32)
        + b2_ref[...], 0.0)
    h = jnp.maximum(
        jnp.dot(h, w3_ref[...], preferred_element_type=jnp.float32)
        + b3_ref[...], 0.0)

    # Layer 4 ([H] -> 1): keep it off the MXU (degenerate N=1 matmul) and make
    # the store lane-dense: elementwise mul on VPU, transpose + sublane-sum on
    # XLU, producing a (1, tile_b) row with all 128 lanes populated.
    hw = h * w4_ref[...]                                   # (tile_b, H)
    q_row = jnp.sum(hw.T, axis=0, keepdims=True)           # (1, tile_b)
    o_ref[...] = (q_row + b4_ref[...]).astype(o_ref.dtype)


@functools.partial(jax.jit, static_argnames=("tile_b",))
def dqn_forward(s, a, params, *, tile_b=None):
    """Pallas implementation of DQN.forward(s, a).

    s: [B, dim_state] float32
    a: [B, dim_action] float32
    params: dict with w1s [ds,H], w1a [da,H], b1 [1,H], w2/w3 [H,H],
            b2/b3 [1,H], w4 [1,H], b4 [1,1].
    returns q: [B, 1] float32
    """
    s = s.astype(jnp.float32)
    a = a.astype(jnp.float32)
    B, dim_state = s.shape
    dim_action = a.shape[1]

    # --- pick the batch tile: one fat grid step unless the batch is huge ---
    if tile_b is None or tile_b >= B:
        tile_b = B if B <= 1024 else 1024
    if tile_b < B and tile_b % 128:
        # multi-tile grids need 128-multiple tiles so the (1, tile_b) output
        # block stays lane-aligned
        tile_b = min(B, ((tile_b + 127) // 128) * 128)

    pad = (-B) % tile_b
    if pad:
        s = jnp.pad(s, ((0, pad), (0, 0)))
        a = jnp.pad(a, ((0, pad), (0, 0)))
    Bp = B + pad
    num_tiles = Bp // tile_b

    # Weights/biases: full arrays every step (index_map constant across grid).
    # At the default grid=(1,) there is no double-buffering churn to avoid.
    const2d = lambda arr: pl.BlockSpec(arr.shape, lambda i: (0, 0))

    # Only shard across TensorCores (v7x megacore) when there is > 1 tile.
    semantics = ("arbitrary",) if num_tiles == 1 else ("parallel",)

    out = pl.pallas_call(
        _dqn_mlp_kernel,
        out_shape=jax.ShapeDtypeStruct((1, Bp), jnp.float32),
        grid_spec=pltpu.PrefetchScalarGridSpec(
            num_scalar_prefetch=0,
            grid=(num_tiles,),
            in_specs=[
                pl.BlockSpec((tile_b, dim_state), lambda i: (i, 0)),   # s tile
                pl.BlockSpec((tile_b, dim_action), lambda i: (i, 0)),  # a tile
                const2d(params["w1s"]), const2d(params["w1a"]), const2d(params["b1"]),
                const2d(params["w2"]), const2d(params["b2"]),
                const2d(params["w3"]), const2d(params["b3"]),
                const2d(params["w4"]), const2d(params["b4"]),
            ],
            out_specs=pl.BlockSpec((1, tile_b), lambda i: (0, i)),
        ),
        compiler_params=pltpu.CompilerParams(dimension_semantics=semantics),
    )(s, a,
      params["w1s"], params["w1a"], params["b1"],
      params["w2"], params["b2"],
      params["w3"], params["b3"],
      params["w4"], params["b4"])

    # (1, Bp) lane-dense row -> (B, 1) column expected by the caller.
    return out[0, :B].reshape(B, 1)


def init_dqn_params(key, dim_state, dim_action, dim_hidden):
    """Deterministic init matching nn.Linear (uniform +-1/sqrt(fan_in)).

    Layer-1 weight is stored pre-split (w1s, w1a); last layer stored as a row."""
    d_in = dim_state + dim_action
    H = dim_hidden
    params = {}

    def uinit(k, shape, fan_in):
        bound = 1.0 / jnp.sqrt(fan_in)
        return jax.random.uniform(k, shape, jnp.float32, -bound, bound)

    key, k1s, k1a, kb1 = jax.random.split(key, 4)
    params["w1s"] = uinit(k1s, (dim_state, H), d_in)
    params["w1a"] = uinit(k1a, (dim_action, H), d_in)
    params["b1"] = uinit(kb1, (1, H), d_in)

    for idx in (2, 3):
        key, kw, kb = jax.random.split(key, 3)
        params[f"w{idx}"] = uinit(kw, (H, H), H)
        params[f"b{idx}"] = uinit(kb, (1, H), H)

    key, kw, kb = jax.random.split(key, 3)
    params["w4"] = uinit(kw, (1, H), H)   # row layout for the lane-dense tail
    params["b4"] = uinit(kb, (1, 1), H)
    return params


def dqn_forward_ref(s, a, params):
    """Pure-JAX reference for validation (same math as torch forward)."""
    h = jnp.maximum(s @ params["w1s"] + a @ params["w1a"] + params["b1"], 0.0)
    h = jnp.maximum(h @ params["w2"] + params["b2"], 0.0)
    h = jnp.maximum(h @ params["w3"] + params["b3"], 0.0)
    return h @ params["w4"].T + params["b4"]


# TODO(synk): Q_target copy / update_target, judge_prediction thresholding and
# the Adam-based update() are training/host-side utilities, not part of the
# forward pass, and are intentionally not translated to Pallas.


if __name__ == "__main__":
    dim_state, dim_action, dim_hidden = 12, 4, 32
    batch = 128  # matches DQN.batch_size

    key = jax.random.PRNGKey(0)
    kp, ks, ka = jax.random.split(key, 3)
    params = init_dqn_params(kp, dim_state, dim_action, dim_hidden)
    s = jax.random.normal(ks, (batch, dim_state), jnp.float32)
    a = jax.random.normal(ka, (batch, dim_action), jnp.float32)

    q = dqn_forward(s, a, params)           # default: single grid step
    q = jax.block_until_ready(q)

    q_ref = dqn_forward_ref(s, a, params)
    assert q.shape == (batch, 1)
    assert jnp.allclose(q, q_ref, atol=1e-4, rtol=1e-4), "mismatch vs reference"

    print("KERNEL_OK")
</pallas_src>

<mosaic_0001>
module attributes {stable_mosaic.version = 11 : i64} {
  func.func @_dqn_mlp_kernel(%arg0: i32, %arg1: memref<128x12xf32, #tpu.memory_space<vmem>>, %arg2: memref<128x4xf32, #tpu.memory_space<vmem>>, %arg3: memref<12x32xf32, #tpu.memory_space<vmem>>, %arg4: memref<4x32xf32, #tpu.memory_space<vmem>>, %arg5: memref<1x32xf32, #tpu.memory_space<vmem>>, %arg6: memref<32x32xf32, #tpu.memory_space<vmem>>, %arg7: memref<1x32xf32, #tpu.memory_space<vmem>>, %arg8: memref<32x32xf32, #tpu.memory_space<vmem>>, %arg9: memref<1x32xf32, #tpu.memory_space<vmem>>, %arg10: memref<1x32xf32, #tpu.memory_space<vmem>>, %arg11: memref<1x1xf32, #tpu.memory_space<vmem>>, %arg12: memref<1x128xf32, #tpu.memory_space<vmem>>) attributes {dimension_semantics = [#tpu.dimension_semantics<arbitrary>], iteration_bounds = array<i64: 1>, scalar_prefetch = 0 : i64, scratch_operands = 0 : i64, tpu.core_type = #tpu.core_type<tc>, window_params = [{transform_indices = @transform_0, window_bounds = array<i64: 128, 12>}, {transform_indices = @transform_1, window_bounds = array<i64: 128, 4>}, {pipeline_mode = #tpu.pipeline_mode<synchronous>, transform_indices = @transform_2, window_bounds = array<i64: 12, 32>}, {pipeline_mode = #tpu.pipeline_mode<synchronous>, transform_indices = @transform_3, window_bounds = array<i64: 4, 32>}, {pipeline_mode = #tpu.pipeline_mode<synchronous>, transform_indices = @transform_4, window_bounds = array<i64: 1, 32>}, {pipeline_mode = #tpu.pipeline_mode<synchronous>, transform_indices = @transform_5, window_bounds = array<i64: 32, 32>}, {pipeline_mode = #tpu.pipeline_mode<synchronous>, transform_indices = @transform_6, window_bounds = array<i64: 1, 32>}, {pipeline_mode = #tpu.pipeline_mode<synchronous>, transform_indices = @transform_7, window_bounds = array<i64: 32, 32>}, {pipeline_mode = #tpu.pipeline_mode<synchronous>, transform_indices = @transform_8, window_bounds = array<i64: 1, 32>}, {pipeline_mode = #tpu.pipeline_mode<synchronous>, transform_indices = @transform_9, window_bounds = array<i64: 1, 32>}, {pipeline_mode = #tpu.pipeline_mode<synchronous>, transform_indices = @transform_10, window_bounds = array<i64: 1, 1>}, {transform_indices = @transform_11, window_bounds = array<i64: 1, 128>}]} {
    %c0 = arith.constant 0 : index
    %c0_0 = arith.constant 0 : index
    %0 = vector.load %arg1[%c0, %c0_0] : memref<128x12xf32, #tpu.memory_space<vmem>>, vector<128x12xf32>
    %c0_1 = arith.constant 0 : index
    %c0_2 = arith.constant 0 : index
    %1 = vector.load %arg2[%c0_1, %c0_2] : memref<128x4xf32, #tpu.memory_space<vmem>>, vector<128x4xf32>
    %c0_3 = arith.constant 0 : index
    %c0_4 = arith.constant 0 : index
    %2 = vector.load %arg3[%c0_3, %c0_4] : memref<12x32xf32, #tpu.memory_space<vmem>>, vector<12x32xf32>
    %cst = arith.constant dense<0.000000e+00> : vector<128x32xf32>
    %3 = tpu.matmul %0, %2, %cst {dimension_numbers = #tpu.dot_dimension_numbers<[1], [0], [0], [1], [0, 0, 1, 1], [], []>} : vector<128x12xf32>, vector<12x32xf32>, vector<128x32xf32> -> vector<128x32xf32>
    %c0_5 = arith.constant 0 : index
    %c0_6 = arith.constant 0 : index
    %4 = vector.load %arg4[%c0_5, %c0_6] : memref<4x32xf32, #tpu.memory_space<vmem>>, vector<4x32xf32>
    %cst_7 = arith.constant dense<0.000000e+00> : vector<128x32xf32>
    %5 = tpu.matmul %1, %4, %cst_7 {dimension_numbers = #tpu.dot_dimension_numbers<[1], [0], [0], [1], [0, 0, 1, 1], [], []>} : vector<128x4xf32>, vector<4x32xf32>, vector<128x32xf32> -> vector<128x32xf32>
    %6 = arith.addf %3, %5 : vector<128x32xf32>
    %c0_8 = arith.constant 0 : index
    %c0_9 = arith.constant 0 : index
    %7 = vector.load %arg5[%c0_8, %c0_9] : memref<1x32xf32, #tpu.memory_space<vmem>>, vector<1x32xf32>
    %8 = vector.broadcast %7 : vector<1x32xf32> to vector<128x32xf32>
    %9 = arith.addf %6, %8 : vector<128x32xf32>
    %cst_10 = arith.constant 0.000000e+00 : f32
    %10 = vector.broadcast %cst_10 : f32 to vector<128x32xf32>
    %11 = arith.maximumf %9, %10 : vector<128x32xf32>
    %c0_11 = arith.constant 0 : index
    %c0_12 = arith.constant 0 : index
    %12 = vector.load %arg6[%c0_11, %c0_12] : memref<32x32xf32, #tpu.memory_space<vmem>>, vector<32x32xf32>
    %cst_13 = arith.constant dense<0.000000e+00> : vector<128x32xf32>
    %13 = tpu.matmul %11, %12, %cst_13 {dimension_numbers = #tpu.dot_dimension_numbers<[1], [0], [0], [1], [0, 0, 1, 1], [], []>} : vector<128x32xf32>, vector<32x32xf32>, vector<128x32xf32> -> vector<128x32xf32>
    %c0_14 = arith.constant 0 : index
    %c0_15 = arith.constant 0 : index
    %14 = vector.load %arg7[%c0_14, %c0_15] : memref<1x32xf32, #tpu.memory_space<vmem>>, vector<1x32xf32>
    %15 = vector.broadcast %14 : vector<1x32xf32> to vector<128x32xf32>
    %16 = arith.addf %13, %15 : vector<128x32xf32>
    %cst_16 = arith.constant 0.000000e+00 : f32
    %17 = vector.broadcast %cst_16 : f32 to vector<128x32xf32>
    %18 = arith.maximumf %16, %17 : vector<128x32xf32>
    %c0_17 = arith.constant 0 : index
    %c0_18 = arith.constant 0 : index
    %19 = vector.load %arg8[%c0_17, %c0_18] : memref<32x32xf32, #tpu.memory_space<vmem>>, vector<32x32xf32>
    %cst_19 = arith.constant dense<0.000000e+00> : vector<128x32xf32>
    %20 = tpu.matmul %18, %19, %cst_19 {dimension_numbers = #tpu.dot_dimension_numbers<[1], [0], [0], [1], [0, 0, 1, 1], [], []>} : vector<128x32xf32>, vector<32x32xf32>, vector<128x32xf32> -> vector<128x32xf32>
    %c0_20 = arith.constant 0 : index
    %c0_21 = arith.constant 0 : index
    %21 = vector.load %arg9[%c0_20, %c0_21] : memref<1x32xf32, #tpu.memory_space<vmem>>, vector<1x32xf32>
    %22 = vector.broadcast %21 : vector<1x32xf32> to vector<128x32xf32>
    %23 = arith.addf %20, %22 : vector<128x32xf32>
    %cst_22 = arith.constant 0.000000e+00 : f32
    %24 = vector.broadcast %cst_22 : f32 to vector<128x32xf32>
    %25 = arith.maximumf %23, %24 : vector<128x32xf32>
    %c0_23 = arith.constant 0 : index
    %c0_24 = arith.constant 0 : index
    %26 = vector.load %arg10[%c0_23, %c0_24] : memref<1x32xf32, #tpu.memory_space<vmem>>, vector<1x32xf32>
    %27 = vector.broadcast %26 : vector<1x32xf32> to vector<128x32xf32>
    %28 = arith.mulf %25, %27 : vector<128x32xf32>
    %29 = tpu.transpose %28, [1, 0] : vector<128x32xf32> -> vector<32x128xf32>
    %cst_25 = arith.constant dense<0.000000e+00> : vector<128xf32>
    %30 = vector.multi_reduction <add>, %29, %cst_25 [0] : vector<32x128xf32> to vector<128xf32>
    %31 = vector.shape_cast %30 : vector<128xf32> to vector<1x128xf32>
    %c0_26 = arith.constant 0 : index
    %c0_27 = arith.constant 0 : index
    %32 = vector.load %arg11[%c0_26, %c0_27] : memref<1x1xf32, #tpu.memory_space<vmem>>, vector<1x1xf32>
    %33 = vector.broadcast %32 : vector<1x1xf32> to vector<1x128xf32>
    %34 = arith.addf %31, %33 : vector<1x128xf32>
    %c0_28 = arith.constant 0 : index
    %c0_29 = arith.constant 0 : index
    %35 = vector.load %arg12[%c0_28, %c0_29] : memref<1x128xf32, #tpu.memory_space<vmem>>, vector<1x128xf32>
    tpu.vector_store %arg12[%c0_28, %c0_29], %34 {strides = array<i32>} : memref<1x128xf32, #tpu.memory_space<vmem>>, vector<1x128xf32>,
    return
  }
  func.func @transform_0(%arg0: i32) -> (i32, i32) {
    %c0_i32 = arith.constant 0 : i32
    %c0_i32_0 = arith.constant 0 : i32
    return %arg0, %c0_i32 : i32, i32
  }
  func.func @transform_1(%arg0: i32) -> (i32, i32) {
    %c0_i32 = arith.constant 0 : i32
    %c0_i32_0 = arith.constant 0 : i32
    return %arg0, %c0_i32 : i32, i32
  }
  func.func @transform_2(%arg0: i32) -> (i32, i32) {
    %c0_i32 = arith.constant 0 : i32
    %c0_i32_0 = arith.constant 0 : i32
    %c0_i32_1 = arith.constant 0 : i32
    return %c0_i32, %c0_i32_0 : i32, i32
  }
  func.func @transform_3(%arg0: i32) -> (i32, i32) {
    %c0_i32 = arith.constant 0 : i32
    %c0_i32_0 = arith.constant 0 : i32
    %c0_i32_1 = arith.constant 0 : i32
    return %c0_i32, %c0_i32_0 : i32, i32
  }
  func.func @transform_4(%arg0: i32) -> (i32, i32) {
    %c0_i32 = arith.constant 0 : i32
    %c0_i32_0 = arith.constant 0 : i32
    %c0_i32_1 = arith.constant 0 : i32
    return %c0_i32, %c0_i32_0 : i32, i32
  }
  func.func @transform_5(%arg0: i32) -> (i32, i32) {
    %c0_i32 = arith.constant 0 : i32
    %c0_i32_0 = arith.constant 0 : i32
    %c0_i32_1 = arith.constant 0 : i32
    return %c0_i32, %c0_i32_0 : i32, i32
  }
  func.func @transform_6(%arg0: i32) -> (i32, i32) {
    %c0_i32 = arith.constant 0 : i32
    %c0_i32_0 = arith.constant 0 : i32
    %c0_i32_1 = arith.constant 0 : i32
    return %c0_i32, %c0_i32_0 : i32, i32
  }
  func.func @transform_7(%arg0: i32) -> (i32, i32) {
    %c0_i32 = arith.constant 0 : i32
    %c0_i32_0 = arith.constant 0 : i32
    %c0_i32_1 = arith.constant 0 : i32
    return %c0_i32, %c0_i32_0 : i32, i32
  }
  func.func @transform_8(%arg0: i32) -> (i32, i32) {
    %c0_i32 = arith.constant 0 : i32
    %c0_i32_0 = arith.constant 0 : i32
    %c0_i32_1 = arith.constant 0 : i32
    return %c0_i32, %c0_i32_0 : i32, i32
  }
  func.func @transform_9(%arg0: i32) -> (i32, i32) {
    %c0_i32 = arith.constant 0 : i32
    %c0_i32_0 = arith.constant 0 : i32
    %c0_i32_1 = arith.constant 0 : i32
    return %c0_i32, %c0_i32_0 : i32, i32
  }
  func.func @transform_10(%arg0: i32) -> (i32, i32) {
    %c0_i32 = arith.constant 0 : i32
    %c0_i32_0 = arith.constant 0 : i32
    %c0_i32_1 = arith.constant 0 : i32
    return %c0_i32, %c0_i32_0 : i32, i32
  }
  func.func @transform_11(%arg0: i32) -> (i32, i32) {
    %c0_i32 = arith.constant 0 : i32
    %c0_i32_0 = arith.constant 0 : i32
    return %c0_i32, %arg0 : i32, i32
  }
}

</mosaic_0001>

<llo_original>
// kernel: dqn_forward.1
$region0: #{dqn_forward.1}
  #allocation0 [shape = 'u32[]', space=smem, size = 0x4, offset = 0x4, fixed_abs, tag = 'smem constant byte address 0x4 - core index']
  #allocation1 [shape = 'u32[144,128]{1,0:T(1,128)}', space=vmem, size = 0x12000, scoped, tag = 'internal scratch']
  #allocation2 [shape = 'f32[1,1]{1,0:T(1,128)S(1)}', space=vmem, size = 0x200, scoped, tag = 'scoped memory for dqn_forward.1']
  %s0 = inlined_call_operand.vmem [shape: f32[128,12], index: 0, kind: input, shape index: {}]
  %s1 = inlined_call_operand.vmem [shape: f32[128,4], index: 1, kind: input, shape index: {}]
  %s2 = inlined_call_operand.vmem [shape: f32[12,32], index: 2, kind: input, shape index: {}]
  %s3 = inlined_call_operand.vmem [shape: f32[4,32], index: 3, kind: input, shape index: {}]
  %s4 = inlined_call_operand.vmem [shape: f32[1,32], index: 4, kind: input, shape index: {}]
  %s5 = inlined_call_operand.vmem [shape: f32[32,32], index: 5, kind: input, shape index: {}]
  %s6 = inlined_call_operand.vmem [shape: f32[1,32], index: 6, kind: input, shape index: {}]
  %s7 = inlined_call_operand.vmem [shape: f32[32,32], index: 7, kind: input, shape index: {}]
  %s8 = inlined_call_operand.vmem [shape: f32[1,32], index: 8, kind: input, shape index: {}]
  %s9 = inlined_call_operand.vmem [shape: f32[1,32], index: 9, kind: input, shape index: {}]
  %s10 = inlined_call_operand.<no memory space> [shape: f32[1,1], index: 10, kind: input, shape index: {}]
  %s11 = inlined_call_operand.hbm [shape: f32[1,128], index: 11, kind: output, shape index: {}]
  %s12 = sld [smem:[#allocation0]]
  $region54: #{dqn_forward.1} parent=0
    _
  %s14 = ssub.s32 1, %s12
  %s15 = scalar_select 0, %s14, %s12
  %v16 = vstv %s10
  %17 = vst [vmem:[#allocation2] sm:$0x1] %v16
  $region1: #{dqn_forward.1} parent=0
    #allocation3 [shape = 'u8[512]{0}', space=vmem, size = 0x400, scoped, tag = 'output window, operand 0, single buffered']
    #allocation4 [shape = 's32[1]{0}', space=sflag, size = 0x4, scoped, tag = 'scoped memory for dqn_forward.1']
    %18 = vsyncpa [#allocation4], 0
    // Predicated region
    $region2: #{dqn_forward.1} parent=1 // pred_check
      _
    $region3: #{dqn_forward.1} parent=1 // pred_check_branch
      %20 = sbr.rel (0) target = $region5
    $region4: #{dqn_forward.1} parent=1 // pred_region
      _
    $region5: #{dqn_forward.1} parent=1 // pred_fallthru
      _
    // Predicated region
    $region6: #{dqn_forward.1} parent=1 // pred_check
      _
    $region7: #{dqn_forward.1} parent=1 // pred_check_branch
      %22 = sbr.rel (0) target = $region9
    $region8: #{dqn_forward.1} parent=1 // pred_region
      _
    $region9: #{dqn_forward.1} parent=1 // pred_fallthru
      _
    // Predicated region
    $region10: #{dqn_forward.1} parent=1 // pred_check
      _
    $region11: #{dqn_forward.1} parent=1 // pred_check_branch
      %24 = sbr.rel (0) target = $region13
    $region12: #{dqn_forward.1} parent=1 // pred_region
      _
    $region13: #{dqn_forward.1} parent=1 // pred_fallthru
      _
    // Predicated region
    $region14: #{dqn_forward.1} parent=1 // pred_check
      _
    $region15: #{dqn_forward.1} parent=1 // pred_check_branch
      %26 = sbr.rel (0) target = $region17
    $region16: #{dqn_forward.1} parent=1 // pred_region
      _
    $region17: #{dqn_forward.1} parent=1 // pred_fallthru
      _
    // Predicated region
    $region18: #{dqn_forward.1} parent=1 // pred_check
      _
    $region19: #{dqn_forward.1} parent=1 // pred_check_branch
      %28 = sbr.rel (0) target = $region21
    $region20: #{dqn_forward.1} parent=1 // pred_region
      _
    $region21: #{dqn_forward.1} parent=1 // pred_fallthru
      _
    // Predicated region
    $region22: #{dqn_forward.1} parent=1 // pred_check
      _
    $region23: #{dqn_forward.1} parent=1 // pred_check_branch
      %30 = sbr.rel (0) target = $region25
    $region24: #{dqn_forward.1} parent=1 // pred_region
      _
    $region25: #{dqn_forward.1} parent=1 // pred_fallthru
      _
    // Predicated region
    $region26: #{dqn_forward.1} parent=1 // pred_check
      _
    $region27: #{dqn_forward.1} parent=1 // pred_check_branch
      %32 = sbr.rel (0) target = $region29
    $region28: #{dqn_forward.1} parent=1 // pred_region
      _
    $region29: #{dqn_forward.1} parent=1 // pred_fallthru
      _
    // Predicated region
    $region30: #{dqn_forward.1} parent=1 // pred_check
      _
    $region31: #{dqn_forward.1} parent=1 // pred_check_branch
      %34 = sbr.rel (0) target = $region33
    $region32: #{dqn_forward.1} parent=1 // pred_region
      _
    $region33: #{dqn_forward.1} parent=1 // pred_fallthru
      _
    // Predicated region
    $region34: #{dqn_forward.1} parent=1 // pred_check
      _
    $region35: #{dqn_forward.1} parent=1 // pred_check_branch
      %36 = sbr.rel (0) target = $region37
    $region36: #{dqn_forward.1} parent=1 // pred_region
      _
    $region37: #{dqn_forward.1} parent=1 // pred_fallthru
      _
    // Predicated region
    $region38: #{dqn_forward.1} parent=1 // pred_check
      _
    $region39: #{dqn_forward.1} parent=1 // pred_check_branch
      %38 = sbr.rel (0) target = $region41
    $region40: #{dqn_forward.1} parent=1 // pred_region
      _
    $region41: #{dqn_forward.1} parent=1 // pred_fallthru
      _
    // Predicated region
    $region42: #{dqn_forward.1} parent=1 // pred_check
      _
    $region43: #{dqn_forward.1} parent=1 // pred_check_branch
      %40 = sbr.rel (0) target = $region45
    $region44: #{dqn_forward.1} parent=1 // pred_region
      _
    $region45: #{dqn_forward.1} parent=1 // pred_fallthru
      _
    %v41 = vld [vmem:[%s0] sm:$0xff]
    %v42 = vld [vmem:[%s0 + $0x8] sm:$0xff]
    %v43 = vld [vmem:[%s0 + $0x10] sm:$0xff]
    %v44 = vld [vmem:[%s0 + $0x18] sm:$0xff]
    %v45 = vld [vmem:[%s0 + $0x20] sm:$0xff]
    %v46 = vld [vmem:[%s0 + $0x28] sm:$0xff]
    %v47 = vld [vmem:[%s0 + $0x30] sm:$0xff]
    %v48 = vld [vmem:[%s0 + $0x38] sm:$0xff]
    %v49 = vld [vmem:[%s0 + $0x40] sm:$0xff]
    %v50 = vld [vmem:[%s0 + $0x48] sm:$0xff]
    %v51 = vld [vmem:[%s0 + $0x50] sm:$0xff]
    %v52 = vld [vmem:[%s0 + $0x58] sm:$0xff]
    %v53 = vld [vmem:[%s0 + $0x60] sm:$0xff]
    %v54 = vld [vmem:[%s0 + $0x68] sm:$0xff]
    %v55 = vld [vmem:[%s0 + $0x70] sm:$0xff]
    %v56 = vld [vmem:[%s0 + $0x78] sm:$0xff]
    %v57 = vld [vmem:[%s1] sm:$0xff]
    %v58 = vld [vmem:[%s1 + $0x8] sm:$0xff]
    %v59 = vld [vmem:[%s1 + $0x10] sm:$0xff]
    %v60 = vld [vmem:[%s1 + $0x18] sm:$0xff]
    %v61 = vld [vmem:[%s1 + $0x20] sm:$0xff]
    %v62 = vld [vmem:[%s1 + $0x28] sm:$0xff]
    %v63 = vld [vmem:[%s1 + $0x30] sm:$0xff]
    %v64 = vld [vmem:[%s1 + $0x38] sm:$0xff]
    %v65 = vld [vmem:[%s1 + $0x40] sm:$0xff]
    %v66 = vld [vmem:[%s1 + $0x48] sm:$0xff]
    %v67 = vld [vmem:[%s1 + $0x50] sm:$0xff]
    %v68 = vld [vmem:[%s1 + $0x58] sm:$0xff]
    %v69 = vld [vmem:[%s1 + $0x60] sm:$0xff]
    %v70 = vld [vmem:[%s1 + $0x68] sm:$0xff]
    %v71 = vld [vmem:[%s1 + $0x70] sm:$0xff]
    %v72 = vld [vmem:[%s1 + $0x78] sm:$0xff]
    %v73 = vld [vmem:[%s2] sm:$0xff]
    %v74 = vld [vmem:[%s2 + $0x8] sm:$0xf]
    %v75 = vld [vmem:[%s3] sm:$0xf]
    %vm76 = vcmask 31744
    %v78 = vsel %vm76, %v57, 0
    %v81 = vsel %vm76, %v58, 0
    %v84 = vsel %vm76, %v59, 0
    %v87 = vsel %vm76, %v60, 0
    %v90 = vsel %vm76, %v61, 0
    %v93 = vsel %vm76, %v62, 0
    %v96 = vsel %vm76, %v63, 0
    %v99 = vsel %vm76, %v64, 0
    %v102 = vsel %vm76, %v65, 0
    %v105 = vsel %vm76, %v66, 0
    %v108 = vsel %vm76, %v67, 0
    %v111 = vsel %vm76, %v68, 0
    %v114 = vsel %vm76, %v69, 0
    %v117 = vsel %vm76, %v70, 0
    %v120 = vsel %vm76, %v71, 0
    %v123 = vsel %vm76, %v72, 0
    %vm125 = vcmask 1043456
    %v127 = vsel %vm125, %v75, 0
    %129 = vmatprep.subr.mxu0 0.0
    %130 = vmatpush1.msra.mxu0 %v127
    %131 = vmatprep.subr.mxu0 0.0
    %132 = vmatpush1.msra.mxu0 0.0
    %133 = vmatprep.subr.mxu0 0.0
    %134 = vmatpush1.msra.mxu0 0.0
    %135 = vmatprep.subr.mxu0 0.0
    %136 = vmatpush1.msra.mxu0 0.0
    %137 = vmatprep.subr.mxu0 0.0
    %138 = vmatpush1.msra.mxu0 0.0
    %139 = vmatprep.subr.mxu0 0.0
    %140 = vmatpush1.msra.mxu0 0.0
    %141 = vmatprep.subr.mxu0 0.0
    %142 = vmatpush1.msra.mxu0 0.0
    %143 = vmatprep.subr.mxu0 0.0
    %144 = vmatpush1.msra.mxu0 0.0
    %145 = vmatprep.subr.mxu0 0.0
    %146 = vmatpush1.msra.mxu0 0.0
    %147 = vmatprep.subr.mxu0 0.0
    %148 = vmatpush1.msra.mxu0 0.0
    %149 = vmatprep.subr.mxu0 0.0
    %150 = vmatpush1.msra.mxu0 0.0
    %151 = vmatprep.subr.mxu0 0.0
    %152 = vmatpush1.msra.mxu0 0.0
    %153 = vmatprep.subr.mxu0 0.0
    %154 = vmatpush1.msra.mxu0 0.0
    %155 = vmatprep.subr.mxu0 0.0
    %156 = vmatpush1.msra.mxu0 0.0
    %157 = vmatprep.subr.mxu0 0.0
    %158 = vmatpush1.msra.mxu0 0.0
    %159 = vmatprep.subr.mxu0 0.0
    %160 = vmatpush1.msra.mxu0 0.0
    %161 = vmatprep.subr.mxu0 0.0
    %162 = vmatpush1.msra.mxu0 0.0
    %163 = vmatprep.subr.mxu0 0.0
    %164 = vmatpush1.msra.mxu0 0.0
    %165 = vmatprep.subr.mxu0 0.0
    %166 = vmatpush1.msra.mxu0 0.0
    %167 = vmatprep.subr.mxu0 0.0
    %168 = vmatpush1.msra.mxu0 0.0
    %169 = vmatprep.subr.mxu0 0.0
    %170 = vmatpush1.msra.mxu0 0.0
    %171 = vmatprep.subr.mxu0 0.0
    %172 = vmatpush1.msra.mxu0 0.0
    %173 = vmatprep.subr.mxu0 0.0
    %174 = vmatpush1.msra.mxu0 0.0
    %175 = vmatprep.subr.mxu0 0.0
    %176 = vmatpush1.msra.mxu0 0.0
    %177 = vmatprep.subr.mxu0 0.0
    %178 = vmatpush1.msra.mxu0 0.0
    %179 = vmatprep.subr.mxu0 0.0
    %180 = vmatpush1.msra.mxu0 0.0
    %181 = vmatprep.subr.mxu0 0.0
    %182 = vmatpush1.msra.mxu0 0.0
    %183 = vmatprep.subr.mxu0 0.0
    %184 = vmatpush1.msra.mxu0 0.0
    %185 = vmatprep.subr.mxu0 0.0
    %186 = vmatpush1.msra.mxu0 0.0
    %187 = vmatprep.subr.mxu0 0.0
    %188 = vmatpush1.msra.mxu0 0.0
    %189 = vmatprep.subr.mxu0 0.0
    %190 = vmatpush1.msra.mxu0 0.0
    %191 = vmatprep.subr.mxu0 0.0
    %192 = vmatpush1.msra.mxu0 0.0
    %193 = vmatprep.mubr.f32.mxu0 0.0
    %194 = vmatmul.mubr.f32.gmra.mrb[0].mxu0 %v78
    %v195 = vpop.f32.mrb[0].mxu0
    %v196 = vadd.f32 0.0, %v195
    %v197 = vpop.f32.mrb[0].mxu0
    %198 = vmatprep.mubr.f32.mxu0 0.0
    %199 = vmatmul.mubr.f32.gmra.mrb[0].mxu0 %v81
    %v200 = vpop.f32.mrb[0].mxu0
    %v201 = vadd.f32 0.0, %v200
    %v202 = vpop.f32.mrb[0].mxu0
    %203 = vmatprep.mubr.f32.mxu0 0.0
    %204 = vmatmul.mubr.f32.gmra.mrb[0].mxu0 %v84
    %v205 = vpop.f32.mrb[0].mxu0
    %v206 = vadd.f32 0.0, %v205
    %v207 = vpop.f32.mrb[0].mxu0
    %208 = vmatprep.mubr.f32.mxu0 0.0
    %209 = vmatmul.mubr.f32.gmra.mrb[0].mxu0 %v87
    %v210 = vpop.f32.mrb[0].mxu0
    %v211 = vadd.f32 0.0, %v210
    %v212 = vpop.f32.mrb[0].mxu0
    %213 = vmatprep.mubr.f32.mxu0 0.0
    %214 = vmatmul.mubr.f32.gmra.mrb[0].mxu0 %v90
    %v215 = vpop.f32.mrb[0].mxu0
    %v216 = vadd.f32 0.0, %v215
    %v217 = vpop.f32.mrb[0].mxu0
    %218 = vmatprep.mubr.f32.mxu0 0.0
    %219 = vmatmul.mubr.f32.gmra.mrb[0].mxu0 %v93
    %v220 = vpop.f32.mrb[0].mxu0
    %v221 = vadd.f32 0.0, %v220
    %v222 = vpop.f32.mrb[0].mxu0
    %223 = vmatprep.mubr.f32.mxu0 0.0
    %224 = vmatmul.mubr.f32.gmra.mrb[0].mxu0 %v96
    %v225 = vpop.f32.mrb[0].mxu0
    %v226 = vadd.f32 0.0, %v225
    %v227 = vpop.f32.mrb[0].mxu0
    %228 = vmatprep.mubr.f32.mxu0 0.0
    %229 = vmatmul.mubr.f32.gmra.mrb[0].mxu0 %v99
    %v230 = vpop.f32.mrb[0].mxu0
    %v231 = vadd.f32 0.0, %v230
    %v232 = vpop.f32.mrb[0].mxu0
    %233 = vmatprep.mubr.f32.mxu0 0.0
    %234 = vmatmul.mubr.f32.gmra.mrb[0].mxu0 %v102
    %v235 = vpop.f32.mrb[0].mxu0
    %v236 = vadd.f32 0.0, %v235
    %v237 = vpop.f32.mrb[0].mxu0
    %238 = vmatprep.mubr.f32.mxu0 0.0
    %239 = vmatmul.mubr.f32.gmra.mrb[0].mxu0 %v105
    %v240 = vpop.f32.mrb[0].mxu0
    %v241 = vadd.f32 0.0, %v240
    %v242 = vpop.f32.mrb[0].mxu0
    %243 = vmatprep.mubr.f32.mxu0 0.0
    %244 = vmatmul.mubr.f32.gmra.mrb[0].mxu0 %v108
    %v245 = vpop.f32.mrb[0].mxu0
    %v246 = vadd.f32 0.0, %v245
    %v247 = vpop.f32.mrb[0].mxu0
    %248 = vmatprep.mubr.f32.mxu0 0.0
    %249 = vmatmul.mubr.f32.gmra.mrb[0].mxu0 %v111
    %v250 = vpop.f32.mrb[0].mxu0
    %v251 = vadd.f32 0.0, %v250
    %v252 = vpop.f32.mrb[0].mxu0
    %253 = vmatprep.mubr.f32.mxu0 0.0
    %254 = vmatmul.mubr.f32.gmra.mrb[0].mxu0 %v114
    %v255 = vpop.f32.mrb[0].mxu0
    %v256 = vadd.f32 0.0, %v255
    %v257 = vpop.f32.mrb[0].mxu0
    %258 = vmatprep.mubr.f32.mxu0 0.0
    %259 = vmatmul.mubr.f32.gmra.mrb[0].mxu0 %v117
    %v260 = vpop.f32.mrb[0].mxu0
    %v261 = vadd.f32 0.0, %v260
    %v262 = vpop.f32.mrb[0].mxu0
    %263 = vmatprep.mubr.f32.mxu0 0.0
    %264 = vmatmul.mubr.f32.gmra.mrb[0].mxu0 %v120
    %v265 = vpop.f32.mrb[0].mxu0
    %v266 = vadd.f32 0.0, %v265
    %v267 = vpop.f32.mrb[0].mxu0
    %268 = vmatprep.mubr.f32.mxu0 0.0
    %269 = vmatmul.mubr.f32.gmra.mrb[0].mxu0 %v123
    %v270 = vpop.f32.mrb[0].mxu0
    %v271 = vadd.f32 0.0, %v270
    %v272 = vpop.f32.mrb[0].mxu0
    %273 = vdwg.mxu0
    %vm274 = vcmask 97280
    %v276 = vsel %vm274, %v41, 0
    %v279 = vsel %vm274, %v42, 0
    %v282 = vsel %vm274, %v43, 0
    %v285 = vsel %vm274, %v44, 0
    %v288 = vsel %vm274, %v45, 0
    %v291 = vsel %vm274, %v46, 0
    %v294 = vsel %vm274, %v47, 0
    %v297 = vsel %vm274, %v48, 0
    %v300 = vsel %vm274, %v49, 0
    %v303 = vsel %vm274, %v50, 0
    %v306 = vsel %vm274, %v51, 0
    %v309 = vsel %vm274, %v52, 0
    %v312 = vsel %vm274, %v53, 0
    %v315 = vsel %vm274, %v54, 0
    %v318 = vsel %vm274, %v55, 0
    %v321 = vsel %vm274, %v56, 0
    %v324 = vsel %vm125, %v74, 0
    %326 = vmatprep.subr.mxu0 0.0
    %327 = vmatpush1.msra.mxu0 %v73
    %328 = vmatprep.subr.mxu0 0.0
    %329 = vmatpush1.msra.mxu0 %v324
    %330 = vmatprep.subr.mxu0 0.0
    %331 = vmatpush1.msra.mxu0 0.0
    %332 = vmatprep.subr.mxu0 0.0
    %333 = vmatpush1.msra.mxu0 0.0
    %334 = vmatprep.subr.mxu0 0.0
    %335 = vmatpush1.msra.mxu0 0.0
    %336 = vmatprep.subr.mxu0 0.0
    %337 = vmatpush1.msra.mxu0 0.0
    %338 = vmatprep.subr.mxu0 0.0
    %339 = vmatpush1.msra.mxu0 0.0
    %340 = vmatprep.subr.mxu0 0.0
    %341 = vmatpush1.msra.mxu0 0.0
    %342 = vmatprep.subr.mxu0 0.0
    %343 = vmatpush1.msra.mxu0 0.0
    %344 = vmatprep.subr.mxu0 0.0
    %345 = vmatpush1.msra.mxu0 0.0
    %346 = vmatprep.subr.mxu0 0.0
    %347 = vmatpush1.msra.mxu0 0.0
    %348 = vmatprep.subr.mxu0 0.0
    %349 = vmatpush1.msra.mxu0 0.0
    %350 = vmatprep.subr.mxu0 0.0
    %351 = vmatpush1.msra.mxu0 0.0
    %352 = vmatprep.subr.mxu0 0.0
    %353 = vmatpush1.msra.mxu0 0.0
    %354 = vmatprep.subr.mxu0 0.0
    %355 = vmatpush1.msra.mxu0 0.0
    %356 = vmatprep.subr.mxu0 0.0
    %357 = vmatpush1.msra.mxu0 0.0
    %358 = vmatprep.subr.mxu0 0.0
    %359 = vmatpush1.msra.mxu0 0.0
    %360 = vmatprep.subr.mxu0 0.0
    %361 = vmatpush1.msra.mxu0 0.0
    %362 = vmatprep.subr.mxu0 0.0
    %363 = vmatpush1.msra.mxu0 0.0
    %364 = vmatprep.subr.mxu0 0.0
    %365 = vmatpush1.msra.mxu0 0.0
    %366 = vmatprep.subr.mxu0 0.0
    %367 = vmatpush1.msra.mxu0 0.0
    %368 = vmatprep.subr.mxu0 0.0
    %369 = vmatpush1.msra.mxu0 0.0
    %370 = vmatprep.subr.mxu0 0.0
    %371 = vmatpush1.msra.mxu0 0.0
    %372 = vmatprep.subr.mxu0 0.0
    %373 = vmatpush1.msra.mxu0 0.0
    %374 = vmatprep.subr.mxu0 0.0
    %375 = vmatpush1.msra.mxu0 0.0
    %376 = vmatprep.subr.mxu0 0.0
    %377 = vmatpush1.msra.mxu0 0.0
    %378 = vmatprep.subr.mxu0 0.0
    %379 = vmatpush1.msra.mxu0 0.0
    %380 = vmatprep.subr.mxu0 0.0
    %381 = vmatpush1.msra.mxu0 0.0
    %382 = vmatprep.subr.mxu0 0.0
    %383 = vmatpush1.msra.mxu0 0.0
    %384 = vmatprep.subr.mxu0 0.0
    %385 = vmatpush1.msra.mxu0 0.0
    %386 = vmatprep.subr.mxu0 0.0
    %387 = vmatpush1.msra.mxu0 0.0
    %388 = vmatprep.subr.mxu0 0.0
    %389 = vmatpush1.msra.mxu0 0.0
    %390 = vmatprep.mubr.f32.mxu0 0.0
    %391 = vmatmul.mubr.f32.gmra.mrb[0].mxu0 %v276
    %v392 = vpop.f32.mrb[0].mxu0
    %v393 = vadd.f32 %v196, %v392
    %v394 = vpop.f32.mrb[0].mxu0
    %395 = vmatprep.mubr.f32.mxu0 0.0
    %396 = vmatmul.mubr.f32.gmra.mrb[0].mxu0 %v279
    %v397 = vpop.f32.mrb[0].mxu0
    %v398 = vadd.f32 %v201, %v397
    %v399 = vpop.f32.mrb[0].mxu0
    %400 = vmatprep.mubr.f32.mxu0 0.0
    %401 = vmatmul.mubr.f32.gmra.mrb[0].mxu0 %v282
    %v402 = vpop.f32.mrb[0].mxu0
    %v403 = vadd.f32 %v206, %v402
    %v404 = vpop.f32.mrb[0].mxu0
    %405 = vmatprep.mubr.f32.mxu0 0.0
    %406 = vmatmul.mubr.f32.gmra.mrb[0].mxu0 %v285
    %v407 = vpop.f32.mrb[0].mxu0
    %v408 = vadd.f32 %v211, %v407
    %v409 = vpop.f32.mrb[0].mxu0
    %410 = vmatprep.mubr.f32.mxu0 0.0
    %411 = vmatmul.mubr.f32.gmra.mrb[0].mxu0 %v288
    %v412 = vpop.f32.mrb[0].mxu0
    %v413 = vadd.f32 %v216, %v412
    %v414 = vpop.f32.mrb[0].mxu0
    %415 = vmatprep.mubr.f32.mxu0 0.0
    %416 = vmatmul.mubr.f32.gmra.mrb[0].mxu0 %v291
    %v417 = vpop.f32.mrb[0].mxu0
    %v418 = vadd.f32 %v221, %v417
    %v419 = vpop.f32.mrb[0].mxu0
    %420 = vmatprep.mubr.f32.mxu0 0.0
    %421 = vmatmul.mubr.f32.gmra.mrb[0].mxu0 %v294
    %v422 = vpop.f32.mrb[0].mxu0
    %v423 = vadd.f32 %v226, %v422
    %v424 = vpop.f32.mrb[0].mxu0
    %425 = vmatprep.mubr.f32.mxu0 0.0
    %426 = vmatmul.mubr.f32.gmra.mrb[0].mxu0 %v297
    %v427 = vpop.f32.mrb[0].mxu0
    %v428 = vadd.f32 %v231, %v427
    %v429 = vpop.f32.mrb[0].mxu0
    %430 = vmatprep.mubr.f32.mxu0 0.0
    %431 = vmatmul.mubr.f32.gmra.mrb[0].mxu0 %v300
    %v432 = vpop.f32.mrb[0].mxu0
    %v433 = vadd.f32 %v236, %v432
    %v434 = vpop.f32.mrb[0].mxu0
    %435 = vmatprep.mubr.f32.mxu0 0.0
    %436 = vmatmul.mubr.f32.gmra.mrb[0].mxu0 %v303
    %v437 = vpop.f32.mrb[0].mxu0
    %v438 = vadd.f32 %v241, %v437
    %v439 = vpop.f32.mrb[0].mxu0
    %440 = vmatprep.mubr.f32.mxu0 0.0
    %441 = vmatmul.mubr.f32.gmra.mrb[0].mxu0 %v306
    %v442 = vpop.f32.mrb[0].mxu0
    %v443 = vadd.f32 %v246, %v442
    %v444 = vpop.f32.mrb[0].mxu0
    %445 = vmatprep.mubr.f32.mxu0 0.0
    %446 = vmatmul.mubr.f32.gmra.mrb[0].mxu0 %v309
    %v447 = vpop.f32.mrb[0].mxu0
    %v448 = vadd.f32 %v251, %v447
    %v449 = vpop.f32.mrb[0].mxu0
    %450 = vmatprep.mubr.f32.mxu0 0.0
    %451 = vmatmul.mubr.f32.gmra.mrb[0].mxu0 %v312
    %v452 = vpop.f32.mrb[0].mxu0
    %v453 = vadd.f32 %v256, %v452
    %v454 = vpop.f32.mrb[0].mxu0
    %455 = vmatprep.mubr.f32.mxu0 0.0
    %456 = vmatmul.mubr.f32.gmra.mrb[0].mxu0 %v315
    %v457 = vpop.f32.mrb[0].mxu0
    %v458 = vadd.f32 %v261, %v457
    %v459 = vpop.f32.mrb[0].mxu0
    %460 = vmatprep.mubr.f32.mxu0 0.0
    %461 = vmatmul.mubr.f32.gmra.mrb[0].mxu0 %v318
    %v462 = vpop.f32.mrb[0].mxu0
    %v463 = vadd.f32 %v266, %v462
    %v464 = vpop.f32.mrb[0].mxu0
    %465 = vmatprep.mubr.f32.mxu0 0.0
    %466 = vmatmul.mubr.f32.gmra.mrb[0].mxu0 %v321
    %v467 = vpop.f32.mrb[0].mxu0
    %v468 = vadd.f32 %v271, %v467
    %v469 = vpop.f32.mrb[0].mxu0
    %470 = vdwg.mxu0
    %v471 = vld [vmem:[%s4] sm:$0x1]
    %v473 = vlaneseq
    %v474 = vshrl.u32 %v473, 7
    %v475 = vsub.s32 0, %v474
    %v476 = vrot.slane %v471, %v475
    %v478 = vadd.f32 %v393, %v476
    %v479 = vadd.f32 %v398, %v476
    %v480 = vadd.f32 %v403, %v476
    %v481 = vadd.f32 %v408, %v476
    %v482 = vadd.f32 %v413, %v476
    %v483 = vadd.f32 %v418, %v476
    %v484 = vadd.f32 %v423, %v476
    %v485 = vadd.f32 %v428, %v476
    %v486 = vadd.f32 %v433, %v476
    %v487 = vadd.f32 %v438, %v476
    %v488 = vadd.f32 %v443, %v476
    %v489 = vadd.f32 %v448, %v476
    %v490 = vadd.f32 %v453, %v476
    %v491 = vadd.f32 %v458, %v476
    %v492 = vadd.f32 %v463, %v476
    %v493 = vadd.f32 %v468, %v476
    %v494 = vmax.f32 %v478, 0.0
    %v495 = vmax.f32 %v479, 0.0
    %v496 = vmax.f32 %v480, 0.0
    %v497 = vmax.f32 %v481, 0.0
    %v498 = vmax.f32 %v482, 0.0
    %v499 = vmax.f32 %v483, 0.0
    %v500 = vmax.f32 %v484, 0.0
    %v501 = vmax.f32 %v485, 0.0
    %v502 = vmax.f32 %v486, 0.0
    %v503 = vmax.f32 %v487, 0.0
    %v504 = vmax.f32 %v488, 0.0
    %v505 = vmax.f32 %v489, 0.0
    %v506 = vmax.f32 %v490, 0.0
    %v507 = vmax.f32 %v491, 0.0
    %v508 = vmax.f32 %v492, 0.0
    %v509 = vmax.f32 %v493, 0.0
    %v510 = vld [vmem:[%s5] sm:$0xff]
    %v511 = vld [vmem:[%s5 + $0x8] sm:$0xff]
    %v512 = vld [vmem:[%s5 + $0x10] sm:$0xff]
    %v513 = vld [vmem:[%s5 + $0x18] sm:$0xff]
    %v514 = vld [vmem:[%s6] sm:$0x1]
    %v516 = vlaneseq
    %v517 = vshrl.u32 %v516, 7
    %v518 = vsub.s32 0, %v517
    %v519 = vrot.slane %v514, %v518
    %vm521 = vcmask 261120
    %v523 = vsel %vm521, %v494, 0
    %v526 = vsel %vm521, %v495, 0
    %v529 = vsel %vm521, %v496, 0
    %v532 = vsel %vm521, %v497, 0
    %v535 = vsel %vm521, %v498, 0
    %v538 = vsel %vm521, %v499, 0
    %v541 = vsel %vm521, %v500, 0
    %v544 = vsel %vm521, %v501, 0
    %v547 = vsel %vm521, %v502, 0
    %v550 = vsel %vm521, %v503, 0
    %v553 = vsel %vm521, %v504, 0
    %v556 = vsel %vm521, %v505, 0
    %v559 = vsel %vm521, %v506, 0
    %v562 = vsel %vm521, %v507, 0
    %v565 = vsel %vm521, %v508, 0
    %v568 = vsel %vm521, %v509, 0
    %570 = vmatprep.subr.mxu0 0.0
    %571 = vmatpush1.msra.mxu0 %v510
    %572 = vmatprep.subr.mxu0 0.0
    %573 = vmatpush1.msra.mxu0 %v511
    %574 = vmatprep.subr.mxu0 0.0
    %575 = vmatpush1.msra.mxu0 %v512
    %576 = vmatprep.subr.mxu0 0.0
    %577 = vmatpush1.msra.mxu0 %v513
    %578 = vmatprep.subr.mxu0 0.0
    %579 = vmatpush1.msra.mxu0 0.0
    %580 = vmatprep.subr.mxu0 0.0
    %581 = vmatpush1.msra.mxu0 0.0
    %582 = vmatprep.subr.mxu0 0.0
    %583 = vmatpush1.msra.mxu0 0.0
    %584 = vmatprep.subr.mxu0 0.0
    %585 = vmatpush1.msra.mxu0 0.0
    %586 = vmatprep.subr.mxu0 0.0
    %587 = vmatpush1.msra.mxu0 0.0
    %588 = vmatprep.subr.mxu0 0.0
    %589 = vmatpush1.msra.mxu0 0.0
    %590 = vmatprep.subr.mxu0 0.0
    %591 = vmatpush1.msra.mxu0 0.0
    %592 = vmatprep.subr.mxu0 0.0
    %593 = vmatpush1.msra.mxu0 0.0
    %594 = vmatprep.subr.mxu0 0.0
    %595 = vmatpush1.msra.mxu0 0.0
    %596 = vmatprep.subr.mxu0 0.0
    %597 = vmatpush1.msra.mxu0 0.0
    %598 = vmatprep.subr.mxu0 0.0
    %599 = vmatpush1.msra.mxu0 0.0
    %600 = vmatprep.subr.mxu0 0.0
    %601 = vmatpush1.msra.mxu0 0.0
    %602 = vmatprep.subr.mxu0 0.0
    %603 = vmatpush1.msra.mxu0 0.0
    %604 = vmatprep.subr.mxu0 0.0
    %605 = vmatpush1.msra.mxu0 0.0
    %606 = vmatprep.subr.mxu0 0.0
    %607 = vmatpush1.msra.mxu0 0.0
    %608 = vmatprep.subr.mxu0 0.0
    %609 = vmatpush1.msra.mxu0 0.0
    %610 = vmatprep.subr.mxu0 0.0
    %611 = vmatpush1.msra.mxu0 0.0
    %612 = vmatprep.subr.mxu0 0.0
    %613 = vmatpush1.msra.mxu0 0.0
    %614 = vmatprep.subr.mxu0 0.0
    %615 = vmatpush1.msra.mxu0 0.0
    %616 = vmatprep.subr.mxu0 0.0
    %617 = vmatpush1.msra.mxu0 0.0
    %618 = vmatprep.subr.mxu0 0.0
    %619 = vmatpush1.msra.mxu0 0.0
    %620 = vmatprep.subr.mxu0 0.0
    %621 = vmatpush1.msra.mxu0 0.0
    %622 = vmatprep.subr.mxu0 0.0
    %623 = vmatpush1.msra.mxu0 0.0
    %624 = vmatprep.subr.mxu0 0.0
    %625 = vmatpush1.msra.mxu0 0.0
    %626 = vmatprep.subr.mxu0 0.0
    %627 = vmatpush1.msra.mxu0 0.0
    %628 = vmatprep.subr.mxu0 0.0
    %629 = vmatpush1.msra.mxu0 0.0
    %630 = vmatprep.subr.mxu0 0.0
    %631 = vmatpush1.msra.mxu0 0.0
    %632 = vmatprep.subr.mxu0 0.0
    %633 = vmatpush1.msra.mxu0 0.0
    %634 = vmatprep.mubr.f32.mxu0 0.0
    %635 = vmatmul.mubr.f32.gmra.mrb[0].mxu0 %v523
    %v636 = vpop.f32.mrb[0].mxu0
    %v637 = vadd.f32 %v519, %v636
    %v638 = vpop.f32.mrb[0].mxu0
    %639 = vmatprep.mubr.f32.mxu0 0.0
    %640 = vmatmul.mubr.f32.gmra.mrb[0].mxu0 %v526
    %v641 = vpop.f32.mrb[0].mxu0
    %v642 = vadd.f32 %v519, %v641
    %v643 = vpop.f32.mrb[0].mxu0
    %644 = vmatprep.mubr.f32.mxu0 0.0
    %645 = vmatmul.mubr.f32.gmra.mrb[0].mxu0 %v529
    %v646 = vpop.f32.mrb[0].mxu0
    %v647 = vadd.f32 %v519, %v646
    %v648 = vpop.f32.mrb[0].mxu0
    %649 = vmatprep.mubr.f32.mxu0 0.0
    %650 = vmatmul.mubr.f32.gmra.mrb[0].mxu0 %v532
    %v651 = vpop.f32.mrb[0].mxu0
    %v652 = vadd.f32 %v519, %v651
    %v653 = vpop.f32.mrb[0].mxu0
    %654 = vmatprep.mubr.f32.mxu0 0.0
    %655 = vmatmul.mubr.f32.gmra.mrb[0].mxu0 %v535
    %v656 = vpop.f32.mrb[0].mxu0
    %v657 = vadd.f32 %v519, %v656
    %v658 = vpop.f32.mrb[0].mxu0
    %659 = vmatprep.mubr.f32.mxu0 0.0
    %660 = vmatmul.mubr.f32.gmra.mrb[0].mxu0 %v538
    %v661 = vpop.f32.mrb[0].mxu0
    %v662 = vadd.f32 %v519, %v661
    %v663 = vpop.f32.mrb[0].mxu0
    %664 = vmatprep.mubr.f32.mxu0 0.0
    %665 = vmatmul.mubr.f32.gmra.mrb[0].mxu0 %v541
    %v666 = vpop.f32.mrb[0].mxu0
    %v667 = vadd.f32 %v519, %v666
    %v668 = vpop.f32.mrb[0].mxu0
    %669 = vmatprep.mubr.f32.mxu0 0.0
    %670 = vmatmul.mubr.f32.gmra.mrb[0].mxu0 %v544
    %v671 = vpop.f32.mrb[0].mxu0
    %v672 = vadd.f32 %v519, %v671
    %v673 = vpop.f32.mrb[0].mxu0
    %674 = vmatprep.mubr.f32.mxu0 0.0
    %675 = vmatmul.mubr.f32.gmra.mrb[0].mxu0 %v547
    %v676 = vpop.f32.mrb[0].mxu0
    %v677 = vadd.f32 %v519, %v676
    %v678 = vpop.f32.mrb[0].mxu0
    %679 = vmatprep.mubr.f32.mxu0 0.0
    %680 = vmatmul.mubr.f32.gmra.mrb[0].mxu0 %v550
    %v681 = vpop.f32.mrb[0].mxu0
    %v682 = vadd.f32 %v519, %v681
    %v683 = vpop.f32.mrb[0].mxu0
    %684 = vmatprep.mubr.f32.mxu0 0.0
    %685 = vmatmul.mubr.f32.gmra.mrb[0].mxu0 %v553
    %v686 = vpop.f32.mrb[0].mxu0
    %v687 = vadd.f32 %v519, %v686
    %v688 = vpop.f32.mrb[0].mxu0
    %689 = vmatprep.mubr.f32.mxu0 0.0
    %690 = vmatmul.mubr.f32.gmra.mrb[0].mxu0 %v556
    %v691 = vpop.f32.mrb[0].mxu0
    %v692 = vadd.f32 %v519, %v691
    %v693 = vpop.f32.mrb[0].mxu0
    %694 = vmatprep.mubr.f32.mxu0 0.0
    %695 = vmatmul.mubr.f32.gmra.mrb[0].mxu0 %v559
    %v696 = vpop.f32.mrb[0].mxu0
    %v697 = vadd.f32 %v519, %v696
    %v698 = vpop.f32.mrb[0].mxu0
    %699 = vmatprep.mubr.f32.mxu0 0.0
    %700 = vmatmul.mubr.f32.gmra.mrb[0].mxu0 %v562
    %v701 = vpop.f32.mrb[0].mxu0
    %v702 = vadd.f32 %v519, %v701
    %v703 = vpop.f32.mrb[0].mxu0
    %704 = vmatprep.mubr.f32.mxu0 0.0
    %705 = vmatmul.mubr.f32.gmra.mrb[0].mxu0 %v565
    %v706 = vpop.f32.mrb[0].mxu0
    %v707 = vadd.f32 %v519, %v706
    %v708 = vpop.f32.mrb[0].mxu0
    %709 = vmatprep.mubr.f32.mxu0 0.0
    %710 = vmatmul.mubr.f32.gmra.mrb[0].mxu0 %v568
    %v711 = vpop.f32.mrb[0].mxu0
    %v712 = vadd.f32 %v519, %v711
    %v713 = vpop.f32.mrb[0].mxu0
    %714 = vdwg.mxu0
    %v715 = vmax.f32 %v637, 0.0
    %v716 = vmax.f32 %v642, 0.0
    %v717 = vmax.f32 %v647, 0.0
    %v718 = vmax.f32 %v652, 0.0
    %v719 = vmax.f32 %v657, 0.0
    %v720 = vmax.f32 %v662, 0.0
    %v721 = vmax.f32 %v667, 0.0
    %v722 = vmax.f32 %v672, 0.0
    %v723 = vmax.f32 %v677, 0.0
    %v724 = vmax.f32 %v682, 0.0
    %v725 = vmax.f32 %v687, 0.0
    %v726 = vmax.f32 %v692, 0.0
    %v727 = vmax.f32 %v697, 0.0
    %v728 = vmax.f32 %v702, 0.0
    %v729 = vmax.f32 %v707, 0.0
    %v730 = vmax.f32 %v712, 0.0
    %v731 = vld [vmem:[%s7] sm:$0xff]
    %v732 = vld [vmem:[%s7 + $0x8] sm:$0xff]
    %v733 = vld [vmem:[%s7 + $0x10] sm:$0xff]
    %v734 = vld [vmem:[%s7 + $0x18] sm:$0xff]
    %v735 = vld [vmem:[%s8] sm:$0x1]
    %v737 = vlaneseq
    %v738 = vshrl.u32 %v737, 7
    %v739 = vsub.s32 0, %v738
    %v740 = vrot.slane %v735, %v739
    %v743 = vsel %vm521, %v715, 0
    %v746 = vsel %vm521, %v716, 0
    %v749 = vsel %vm521, %v717, 0
    %v752 = vsel %vm521, %v718, 0
    %v755 = vsel %vm521, %v719, 0
    %v758 = vsel %vm521, %v720, 0
    %v761 = vsel %vm521, %v721, 0
    %v764 = vsel %vm521, %v722, 0
    %v767 = vsel %vm521, %v723, 0
    %v770 = vsel %vm521, %v724, 0
    %v773 = vsel %vm521, %v725, 0
    %v776 = vsel %vm521, %v726, 0
    %v779 = vsel %vm521, %v727, 0
    %v782 = vsel %vm521, %v728, 0
    %v785 = vsel %vm521, %v729, 0
    %v788 = vsel %vm521, %v730, 0
    %790 = vmatprep.subr.mxu0 0.0
    %791 = vmatpush1.msra.mxu0 %v731
    %792 = vmatprep.subr.mxu0 0.0
    %793 = vmatpush1.msra.mxu0 %v732
    %794 = vmatprep.subr.mxu0 0.0
    %795 = vmatpush1.msra.mxu0 %v733
    %796 = vmatprep.subr.mxu0 0.0
    %797 = vmatpush1.msra.mxu0 %v734
    %798 = vmatprep.subr.mxu0 0.0
    %799 = vmatpush1.msra.mxu0 0.0
    %800 = vmatprep.subr.mxu0 0.0
    %801 = vmatpush1.msra.mxu0 0.0
    %802 = vmatprep.subr.mxu0 0.0
    %803 = vmatpush1.msra.mxu0 0.0
    %804 = vmatprep.subr.mxu0 0.0
    %805 = vmatpush1.msra.mxu0 0.0
    %806 = vmatprep.subr.mxu0 0.0
    %807 = vmatpush1.msra.mxu0 0.0
    %808 = vmatprep.subr.mxu0 0.0
    %809 = vmatpush1.msra.mxu0 0.0
    %810 = vmatprep.subr.mxu0 0.0
    %811 = vmatpush1.msra.mxu0 0.0
    %812 = vmatprep.subr.mxu0 0.0
    %813 = vmatpush1.msra.mxu0 0.0
    %814 = vmatprep.subr.mxu0 0.0
    %815 = vmatpush1.msra.mxu0 0.0
    %816 = vmatprep.subr.mxu0 0.0
    %817 = vmatpush1.msra.mxu0 0.0
    %818 = vmatprep.subr.mxu0 0.0
    %819 = vmatpush1.msra.mxu0 0.0
    %820 = vmatprep.subr.mxu0 0.0
    %821 = vmatpush1.msra.mxu0 0.0
    %822 = vmatprep.subr.mxu0 0.0
    %823 = vmatpush1.msra.mxu0 0.0
    %824 = vmatprep.subr.mxu0 0.0
    %825 = vmatpush1.msra.mxu0 0.0
    %826 = vmatprep.subr.mxu0 0.0
    %827 = vmatpush1.msra.mxu0 0.0
    %828 = vmatprep.subr.mxu0 0.0
    %829 = vmatpush1.msra.mxu0 0.0
    %830 = vmatprep.subr.mxu0 0.0
    %831 = vmatpush1.msra.mxu0 0.0
    %832 = vmatprep.subr.mxu0 0.0
    %833 = vmatpush1.msra.mxu0 0.0
    %834 = vmatprep.subr.mxu0 0.0
    %835 = vmatpush1.msra.mxu0 0.0
    %836 = vmatprep.subr.mxu0 0.0
    %837 = vmatpush1.msra.mxu0 0.0
    %838 = vmatprep.subr.mxu0 0.0
    %839 = vmatpush1.msra.mxu0 0.0
    %840 = vmatprep.subr.mxu0 0.0
    %841 = vmatpush1.msra.mxu0 0.0
    %842 = vmatprep.subr.mxu0 0.0
    %843 = vmatpush1.msra.mxu0 0.0
    %844 = vmatprep.subr.mxu0 0.0
    %845 = vmatpush1.msra.mxu0 0.0
    %846 = vmatprep.subr.mxu0 0.0
    %847 = vmatpush1.msra.mxu0 0.0
    %848 = vmatprep.subr.mxu0 0.0
    %849 = vmatpush1.msra.mxu0 0.0
    %850 = vmatprep.subr.mxu0 0.0
    %851 = vmatpush1.msra.mxu0 0.0
    %852 = vmatprep.subr.mxu0 0.0
    %853 = vmatpush1.msra.mxu0 0.0
    %854 = vmatprep.mubr.f32.mxu0 0.0
    %855 = vmatmul.mubr.f32.gmra.mrb[0].mxu0 %v743
    %v856 = vpop.f32.mrb[0].mxu0
    %v857 = vadd.f32 %v740, %v856
    %v858 = vpop.f32.mrb[0].mxu0
    %859 = vmatprep.mubr.f32.mxu0 0.0
    %860 = vmatmul.mubr.f32.gmra.mrb[0].mxu0 %v746
    %v861 = vpop.f32.mrb[0].mxu0
    %v862 = vadd.f32 %v740, %v861
    %v863 = vpop.f32.mrb[0].mxu0
    %864 = vmatprep.mubr.f32.mxu0 0.0
    %865 = vmatmul.mubr.f32.gmra.mrb[0].mxu0 %v749
    %v866 = vpop.f32.mrb[0].mxu0
    %v867 = vadd.f32 %v740, %v866
    %v868 = vpop.f32.mrb[0].mxu0
    %869 = vmatprep.mubr.f32.mxu0 0.0
    %870 = vmatmul.mubr.f32.gmra.mrb[0].mxu0 %v752
    %v871 = vpop.f32.mrb[0].mxu0
    %v872 = vadd.f32 %v740, %v871
    %v873 = vpop.f32.mrb[0].mxu0
    %874 = vmatprep.mubr.f32.mxu0 0.0
    %875 = vmatmul.mubr.f32.gmra.mrb[0].mxu0 %v755
    %v876 = vpop.f32.mrb[0].mxu0
    %v877 = vadd.f32 %v740, %v876
    %v878 = vpop.f32.mrb[0].mxu0
    %879 = vmatprep.mubr.f32.mxu0 0.0
    %880 = vmatmul.mubr.f32.gmra.mrb[0].mxu0 %v758
    %v881 = vpop.f32.mrb[0].mxu0
    %v882 = vadd.f32 %v740, %v881
    %v883 = vpop.f32.mrb[0].mxu0
    %884 = vmatprep.mubr.f32.mxu0 0.0
    %885 = vmatmul.mubr.f32.gmra.mrb[0].mxu0 %v761
    %v886 = vpop.f32.mrb[0].mxu0
    %v887 = vadd.f32 %v740, %v886
    %v888 = vpop.f32.mrb[0].mxu0
    %889 = vmatprep.mubr.f32.mxu0 0.0
    %890 = vmatmul.mubr.f32.gmra.mrb[0].mxu0 %v764
    %v891 = vpop.f32.mrb[0].mxu0
    %v892 = vadd.f32 %v740, %v891
    %v893 = vpop.f32.mrb[0].mxu0
    %894 = vmatprep.mubr.f32.mxu0 0.0
    %895 = vmatmul.mubr.f32.gmra.mrb[0].mxu0 %v767
    %v896 = vpop.f32.mrb[0].mxu0
    %v897 = vadd.f32 %v740, %v896
    %v898 = vpop.f32.mrb[0].mxu0
    %899 = vmatprep.mubr.f32.mxu0 0.0
    %900 = vmatmul.mubr.f32.gmra.mrb[0].mxu0 %v770
    %v901 = vpop.f32.mrb[0].mxu0
    %v902 = vadd.f32 %v740, %v901
    %v903 = vpop.f32.mrb[0].mxu0
    %904 = vmatprep.mubr.f32.mxu0 0.0
    %905 = vmatmul.mubr.f32.gmra.mrb[0].mxu0 %v773
    %v906 = vpop.f32.mrb[0].mxu0
    %v907 = vadd.f32 %v740, %v906
    %v908 = vpop.f32.mrb[0].mxu0
    %909 = vmatprep.mubr.f32.mxu0 0.0
    %910 = vmatmul.mubr.f32.gmra.mrb[0].mxu0 %v776
    %v911 = vpop.f32.mrb[0].mxu0
    %v912 = vadd.f32 %v740, %v911
    %v913 = vpop.f32.mrb[0].mxu0
    %914 = vmatprep.mubr.f32.mxu0 0.0
    %915 = vmatmul.mubr.f32.gmra.mrb[0].mxu0 %v779
    %v916 = vpop.f32.mrb[0].mxu0
    %v917 = vadd.f32 %v740, %v916
    %v918 = vpop.f32.mrb[0].mxu0
    %919 = vmatprep.mubr.f32.mxu0 0.0
    %920 = vmatmul.mubr.f32.gmra.mrb[0].mxu0 %v782
    %v921 = vpop.f32.mrb[0].mxu0
    %v922 = vadd.f32 %v740, %v921
    %v923 = vpop.f32.mrb[0].mxu0
    %924 = vmatprep.mubr.f32.mxu0 0.0
    %925 = vmatmul.mubr.f32.gmra.mrb[0].mxu0 %v785
    %v926 = vpop.f32.mrb[0].mxu0
    %v927 = vadd.f32 %v740, %v926
    %v928 = vpop.f32.mrb[0].mxu0
    %929 = vmatprep.mubr.f32.mxu0 0.0
    %930 = vmatmul.mubr.f32.gmra.mrb[0].mxu0 %v788
    %v931 = vpop.f32.mrb[0].mxu0
    %v932 = vadd.f32 %v740, %v931
    %v933 = vpop.f32.mrb[0].mxu0
    %934 = vdwg.mxu0
    %v935 = vmax.f32 %v857, 0.0
    %v936 = vmax.f32 %v862, 0.0
    %v937 = vmax.f32 %v867, 0.0
    %v938 = vmax.f32 %v872, 0.0
    %v939 = vmax.f32 %v877, 0.0
    %v940 = vmax.f32 %v882, 0.0
    %v941 = vmax.f32 %v887, 0.0
    %v942 = vmax.f32 %v892, 0.0
    %v943 = vmax.f32 %v897, 0.0
    %v944 = vmax.f32 %v902, 0.0
    %v945 = vmax.f32 %v907, 0.0
    %v946 = vmax.f32 %v912, 0.0
    %v947 = vmax.f32 %v917, 0.0
    %v948 = vmax.f32 %v922, 0.0
    %v949 = vmax.f32 %v927, 0.0
    %v950 = vmax.f32 %v932, 0.0
    %v951 = vld [vmem:[%s9] sm:$0x1]
    %v953 = vlaneseq
    %v954 = vshrl.u32 %v953, 7
    %v955 = vsub.s32 0, %v954
    %v956 = vrot.slane %v951, %v955
    %v958 = vmul.f32 %v935, %v956
    %v959 = vmul.f32 %v936, %v956
    %v960 = vmul.f32 %v937, %v956
    %v961 = vmul.f32 %v938, %v956
    %v962 = vmul.f32 %v939, %v956
    %v963 = vmul.f32 %v940, %v956
    %v964 = vmul.f32 %v941, %v956
    %v965 = vmul.f32 %v942, %v956
    %v966 = vmul.f32 %v943, %v956
    %v967 = vmul.f32 %v944, %v956
    %v968 = vmul.f32 %v945, %v956
    %v969 = vmul.f32 %v946, %v956
    %v970 = vmul.f32 %v947, %v956
    %v971 = vmul.f32 %v948, %v956
    %v972 = vmul.f32 %v949, %v956
    %v973 = vmul.f32 %v950, %v956
    %974 = vxpose.xlu0.b32.start [1/16] %v958, 128
    %975 = vxpose.xlu0.b32.cont [2/16] %v959, 128
    %976 = vxpose.xlu0.b32.cont [3/16] %v960, 128
    %977 = vxpose.xlu0.b32.cont [4/16] %v961, 128
    %978 = vxpose.xlu0.b32.cont [5/16] %v962, 128
    %979 = vxpose.xlu0.b32.cont [6/16] %v963, 128
    %980 = vxpose.xlu0.b32.cont [7/16] %v964, 128
    %981 = vxpose.xlu0.b32.cont [8/16] %v965, 128
    %982 = vxpose.xlu0.b32.cont [9/16] %v966, 128
    %983 = vxpose.xlu0.b32.cont [10/16] %v967, 128
    %984 = vxpose.xlu0.b32.cont [11/16] %v968, 128
    %985 = vxpose.xlu0.b32.cont [12/16] %v969, 128
    %986 = vxpose.xlu0.b32.cont [13/16] %v970, 128
    %987 = vxpose.xlu0.b32.cont [14/16] %v971, 128
    %988 = vxpose.xlu0.b32.cont [15/16] %v972, 128
    %989 = vxpose.xlu0.b32.end [16/16] %v973, 128
    %v990 = vpop.trf.xlu0
    %v991 = vpop.trf.xlu0
    %v992 = vpop.trf.xlu0
    %v993 = vpop.trf.xlu0
    %v994 = vpop.trf.xlu0
    %v995 = vpop.trf.xlu0
    %v996 = vpop.trf.xlu0
    %v997 = vpop.trf.xlu0
    %v998 = vpop.trf.xlu0
    %v999 = vpop.trf.xlu0
    %v1000 = vpop.trf.xlu0
    %v1001 = vpop.trf.xlu0
    %v1002 = vpop.trf.xlu0
    %v1003 = vpop.trf.xlu0
    %v1004 = vpop.trf.xlu0
    %v1005 = vpop.trf.xlu0
    %v1006 = vadd.f32 %v990, %v991
    %v1007 = vadd.f32 %v1006, %v992
    %v1008 = vadd.f32 %v1007, %v993
    %v1009 = vrot.slane %v1008, 4
    %v1010 = vadd.f32 %v1008, %v1009
    %v1011 = vrot.slane %v1010, 2
    %v1012 = vadd.f32 %v1010, %v1011
    %v1013 = vrot.slane %v1012, 1
    %v1014 = vadd.f32 %v1012, %v1013
    %v1015 = vld [vmem:[#allocation2] sm:$0x1]
    %1017 = vset.pattern.permute.xlu0 0
    %1018 = vperm.xlu0 %1017, %v1015
    %v1019 = vpop.permute.xlu0 %1018
    %v1021 = vlaneseq
    %v1022 = vshrl.u32 %v1021, 7
    %v1023 = vsub.s32 0, %v1022
    %v1024 = vrot.slane %v1019, %v1023
    %v1025 = vadd.f32 %v1014, %v1024
    %1026 = vst [vmem:[#allocation3] sm:$0x1] %v1025
    // Predicated region
    $region46: #{dqn_forward.1} parent=1 // pred_check
      _
    $region47: #{dqn_forward.1} parent=1 // pred_check_branch
      %1028 = sbr.rel (0) target = $region49
    $region48: #{dqn_forward.1} parent=1 // pred_region
      %s1030 = ssub.s32 16, 16
      %1031 = vsyncadd [#allocation4], %s1030
      %s1033 = sshll.u32 [#allocation3], 4
      %s1034 = int_to_ptr.vmem [resolvable:$true] %s1033
      %1036 = dma.vmem_to_hbm [thread:$0]  %s1034, 16, %s11, [#allocation4]
    $region49: #{dqn_forward.1} parent=1 // pred_fallthru
      _
    // Predicated region
    $region50: #{dqn_forward.1} parent=1 // pred_check
      _
    $region51: #{dqn_forward.1} parent=1 // pred_check_branch
      %1038 = sbr.rel (0) target = $region53
    $region52: #{dqn_forward.1} parent=1 // pred_region
      %1039 = dma.done [#allocation4], 16
    $region53: #{dqn_forward.1} parent=1 // pred_fallthru
      _
    %1040 = vsyncpa [#allocation4], 1

</llo_original>
